<compile_context>
chip_gen: v6e
topology: v6e:2x2x1
jax: 0.10.0
libtpu: 0.0.40
codegen_flags: <defaults>
</compile_context>

<pallas_src>
import functools

import jax
import jax.numpy as jnp
from jax.experimental import pallas as pl
from jax.experimental.pallas import tpu as pltpu


def _se_kernel(x_ref, w1_ref, w2_ref, o_ref, *, inv_hw):
    # x_ref/o_ref block: (bt, C, HW)   w1: (res, C)   w2: (C, res)
    x = x_ref[...]                                            # keep input dtype

    # --- squeeze: per-(b, c) spatial mean (lane-axis reduction) ---------------
    # Block last dim is exactly HW, so the sum covers only real elements.
    s = jnp.sum(x.astype(jnp.float32), axis=-1)               # (bt, C)
    mean = s * inv_hw                                         # (bt, C)

    # --- excitation: tiny MLP on the VPU (broadcast-mul + lane reduce) --------
    w1 = w1_ref[...].astype(jnp.float32)                      # (res, C)
    w2 = w2_ref[...].astype(jnp.float32)                      # (C, res)
    # y1[b, r] = sum_c w1[r, c] * mean[b, c]
    y1 = jnp.sum(w1[None, :, :] * mean[:, None, :], axis=-1)  # (bt, res)
    y1 = jnp.maximum(y1, 0.0)
    # y2[b, c] = sum_r w2[c, r] * y1[b, r]
    y2 = jnp.sum(w2[None, :, :] * y1[:, None, :], axis=-1)    # (bt, C)
    scale = jax.nn.sigmoid(y2)                                # (bt, C)

    # --- scale: per-(b, c) scalar broadcast over all lanes, in input dtype ----
    o_ref[...] = x * scale[:, :, None].astype(x.dtype)


def _vmem_capacity_bytes():
    """Physical VMEM per TensorCore; falls back to 128 MiB if query fails."""
    try:
        return int(pltpu.get_tpu_info().vmem_capacity_bytes)
    except Exception:
        return 128 * 1024 * 1024


def se_layer_2d(x_nchw, w1, w2, *, target_block_bytes=None, vmem_limit_bytes=None):
    """x_nchw: (B, C, H, W); w1: (res, C) [Linear(C->res).weight]; w2: (C, res)."""
    B, C, H, W = x_nchw.shape
    HW = H * W
    res = w1.shape[0]
    dtype = x_nchw.dtype
    itemsize = jnp.dtype(dtype).itemsize

    # Generation-specific defaults: 64 MiB-VMEM parts (v7x-like, 2 TCs) get
    # smaller blocks / scoped limit; 128 MiB parts (v5e/v6e, 1 TC) go bigger.
    vmem_cap = _vmem_capacity_bytes()
    small_vmem = vmem_cap <= 64 * 1024 * 1024
    if target_block_bytes is None:
        target_block_bytes = (8 << 20) if small_vmem else (16 << 20)
    if vmem_limit_bytes is None:
        vmem_limit_bytes = (48 << 20) if small_vmem else (96 << 20)

    # Native flattened NCHW view: pure reshape, no HBM transpose, no padding.
    x = x_nchw.reshape(B, C, HW)

    # Per-image VMEM footprint (sublane/lane padded) used for block sizing.
    c_pad = ((C + 7) // 8) * 8
    hw_pad = ((HW + 127) // 128) * 128
    per_image_bytes = c_pad * hw_pad * itemsize

    bt = int(max(1, min(B, target_block_bytes // per_image_bytes)))
    if small_vmem and B >= 2:
        # Keep >= 2 grid steps so the "parallel" batch axis can shard across
        # the 2 TensorCores of a v7x-like chip.
        bt = min(bt, max(1, (B + 1) // 2))
    grid = (pl.cdiv(B, bt),)

    kernel = functools.partial(_se_kernel, inv_hw=1.0 / float(HW))

    cost = pl.CostEstimate(
        flops=2 * B * C * HW + 4 * B * C * res,
        transcendentals=B * C,
        bytes_accessed=2 * B * C * HW * itemsize
        + 2 * res * C * jnp.dtype(w1.dtype).itemsize,
    )

    out = pl.pallas_call(
        kernel,
        out_shape=jax.ShapeDtypeStruct((B, C, HW), dtype),
        grid_spec=pltpu.PrefetchScalarGridSpec(
            num_scalar_prefetch=0,
            grid=grid,
            in_specs=[
                pl.BlockSpec((bt, C, HW), lambda b: (b, 0, 0)),
                pl.BlockSpec((res, C), lambda b: (0, 0)),
                pl.BlockSpec((C, res), lambda b: (0, 0)),
            ],
            out_specs=pl.BlockSpec((bt, C, HW), lambda b: (b, 0, 0)),
        ),
        compiler_params=pltpu.CompilerParams(
            dimension_semantics=("parallel",),
            vmem_limit_bytes=vmem_limit_bytes,
        ),
        cost_estimate=cost,
    )(x, w1, w2)

    return out.reshape(B, C, H, W)


def se_layer_2d_ref(x, w1, w2):
    """Pure-JAX reference mirroring the PyTorch forward."""
    y = jnp.mean(x, axis=(2, 3))                 # (B, C)
    y = jnp.maximum(y @ w1.T, 0.0)               # (B, res)
    y = jax.nn.sigmoid(y @ w2.T)                 # (B, C)
    return x * y[:, :, None, None]


if __name__ == "__main__":
    # Module config: channel=8, reduction=4  => res = 2
    B, C, H, W = 2, 8, 16, 16
    reduction = 4
    res = max(C // reduction, 1)

    key = jax.random.PRNGKey(0)
    kx, k1, k2, kx2, kx3 = jax.random.split(key, 5)

    x = jax.random.normal(kx, (B, C, H, W), dtype=jnp.float32)
    # Deterministic synthetic weights (same shapes as nn.Linear(C,res)/nn.Linear(res,C))
    w1 = jax.random.normal(k1, (res, C), dtype=jnp.float32) * 0.5
    w2 = jax.random.normal(k2, (C, res), dtype=jnp.float32) * 0.5

    out = jax.block_until_ready(se_layer_2d(x, w1, w2))
    ref = se_layer_2d_ref(x, w1, w2)
    assert out.shape == (B, C, H, W)
    assert jnp.allclose(out, ref, atol=1e-5, rtol=1e-5), "mismatch vs reference"

    # Check 2: HW not a multiple of 128 (full-dim last block, no host pad/slice).
    H2, W2 = 10, 10
    x2 = jax.random.normal(kx2, (B, C, H2, W2), dtype=jnp.float32)
    out2 = jax.block_until_ready(se_layer_2d(x2, w1, w2))
    ref2 = se_layer_2d_ref(x2, w1, w2)
    assert out2.shape == (B, C, H2, W2)
    assert jnp.allclose(out2, ref2, atol=1e-5, rtol=1e-5), "mismatch (ragged HW)"

    # Check 3: ragged batch tiling (B=3, bt=2 -> cdiv grid with masked last block).
    B3 = 3
    x3 = jax.random.normal(kx3, (B3, C, H, W), dtype=jnp.float32)
    per_img = 8 * ((H * W + 127) // 128 * 128) * 4
    out3 = jax.block_until_ready(
        se_layer_2d(x3, w1, w2, target_block_bytes=2 * per_img))
    ref3 = se_layer_2d_ref(x3, w1, w2)
    assert out3.shape == (B3, C, H, W)
    assert jnp.allclose(out3, ref3, atol=1e-5, rtol=1e-5), "mismatch (ragged batch)"

    print("KERNEL_OK")
</pallas_src>

<mosaic_0001>
module attributes {stable_mosaic.version = 11 : i64} {
  func.func @_se_kernel(%arg0: i32, %arg1: memref<2x8x256xf32, #tpu.memory_space<vmem>>, %arg2: memref<2x8xf32, #tpu.memory_space<vmem>>, %arg3: memref<8x2xf32, #tpu.memory_space<vmem>>, %arg4: memref<2x8x256xf32, #tpu.memory_space<vmem>>) attributes {dimension_semantics = [#tpu.dimension_semantics<parallel>], iteration_bounds = array<i64: 1>, scalar_prefetch = 0 : i64, scratch_operands = 0 : i64, tpu.core_type = #tpu.core_type<tc>, window_params = [{transform_indices = @transform_0, window_bounds = array<i64: 2, 8, 256>}, {pipeline_mode = #tpu.pipeline_mode<synchronous>, transform_indices = @transform_1, window_bounds = array<i64: 2, 8>}, {pipeline_mode = #tpu.pipeline_mode<synchronous>, transform_indices = @transform_2, window_bounds = array<i64: 8, 2>}, {transform_indices = @transform_3, window_bounds = array<i64: 2, 8, 256>}]} {
    %c0 = arith.constant 0 : index
    %c0_0 = arith.constant 0 : index
    %c0_1 = arith.constant 0 : index
    %0 = vector.load %arg1[%c0, %c0_0, %c0_1] : memref<2x8x256xf32, #tpu.memory_space<vmem>>, vector<2x8x256xf32>
    %cst = arith.constant dense<0.000000e+00> : vector<2x8xf32>
    %1 = vector.multi_reduction <add>, %0, %cst [2] : vector<2x8x256xf32> to vector<2x8xf32>
    %cst_2 = arith.constant 3.906250e-03 : f32
    %2 = vector.broadcast %cst_2 : f32 to vector<2x8xf32>
    %3 = arith.mulf %1, %2 : vector<2x8xf32>
    %c0_3 = arith.constant 0 : index
    %c0_4 = arith.constant 0 : index
    %4 = vector.load %arg2[%c0_3, %c0_4] : memref<2x8xf32, #tpu.memory_space<vmem>>, vector<2x8xf32>
    %c0_5 = arith.constant 0 : index
    %c0_6 = arith.constant 0 : index
    %5 = vector.load %arg3[%c0_5, %c0_6] : memref<8x2xf32, #tpu.memory_space<vmem>>, vector<8x2xf32>
    %6 = vector.shape_cast %4 : vector<2x8xf32> to vector<1x2x8xf32>
    %7 = vector.shape_cast %3 : vector<2x8xf32> to vector<2x1x8xf32>
    %8 = vector.broadcast %6 : vector<1x2x8xf32> to vector<2x2x8xf32>
    %9 = vector.broadcast %7 : vector<2x1x8xf32> to vector<2x2x8xf32>
    %10 = arith.mulf %8, %9 : vector<2x2x8xf32>
    %cst_7 = arith.constant dense<0.000000e+00> : vector<2x2xf32>
    %11 = vector.multi_reduction <add>, %10, %cst_7 [2] : vector<2x2x8xf32> to vector<2x2xf32>
    %cst_8 = arith.constant 0.000000e+00 : f32
    %12 = vector.broadcast %cst_8 : f32 to vector<2x2xf32>
    %13 = arith.maximumf %11, %12 : vector<2x2xf32>
    %14 = vector.shape_cast %5 : vector<8x2xf32> to vector<1x8x2xf32>
    %15 = vector.shape_cast %13 : vector<2x2xf32> to vector<2x1x2xf32>
    %16 = vector.broadcast %14 : vector<1x8x2xf32> to vector<2x8x2xf32>
    %17 = vector.broadcast %15 : vector<2x1x2xf32> to vector<2x8x2xf32>
    %18 = arith.mulf %16, %17 : vector<2x8x2xf32>
    %cst_9 = arith.constant dense<0.000000e+00> : vector<2x8xf32>
    %19 = vector.multi_reduction <add>, %18, %cst_9 [2] : vector<2x8x2xf32> to vector<2x8xf32>
    %20 = arith.negf %19 : vector<2x8xf32>
    %21 = math.exp %20 : vector<2x8xf32>
    %cst_10 = arith.constant 1.000000e+00 : f32
    %22 = vector.broadcast %cst_10 : f32 to vector<2x8xf32>
    %23 = arith.addf %22, %21 : vector<2x8xf32>
    %24 = arith.divf %22, %23 : vector<2x8xf32>
    %25 = vector.shape_cast %24 : vector<2x8xf32> to vector<2x8x1xf32>
    %26 = vector.broadcast %25 : vector<2x8x1xf32> to vector<2x8x256xf32>
    %27 = arith.mulf %0, %26 : vector<2x8x256xf32>
    %c0_11 = arith.constant 0 : index
    %c0_12 = arith.constant 0 : index
    %c0_13 = arith.constant 0 : index
    %28 = vector.load %arg4[%c0_11, %c0_12, %c0_13] : memref<2x8x256xf32, #tpu.memory_space<vmem>>, vector<2x8x256xf32>
    tpu.vector_store %arg4[%c0_11, %c0_12, %c0_13], %27 {strides = array<i32>} : memref<2x8x256xf32, #tpu.memory_space<vmem>>, vector<2x8x256xf32>,
    return
  }
  func.func @transform_0(%arg0: i32) -> (i32, i32, i32) {
    %c0_i32 = arith.constant 0 : i32
    %c0_i32_0 = arith.constant 0 : i32
    %c0_i32_1 = arith.constant 0 : i32
    return %arg0, %c0_i32, %c0_i32_0 : i32, i32, i32
  }
  func.func @transform_1(%arg0: i32) -> (i32, i32) {
    %c0_i32 = arith.constant 0 : i32
    %c0_i32_0 = arith.constant 0 : i32
    %c0_i32_1 = arith.constant 0 : i32
    return %c0_i32, %c0_i32_0 : i32, i32
  }
  func.func @transform_2(%arg0: i32) -> (i32, i32) {
    %c0_i32 = arith.constant 0 : i32
    %c0_i32_0 = arith.constant 0 : i32
    %c0_i32_1 = arith.constant 0 : i32
    return %c0_i32, %c0_i32_0 : i32, i32
  }
  func.func @transform_3(%arg0: i32) -> (i32, i32, i32) {
    %c0_i32 = arith.constant 0 : i32
    %c0_i32_0 = arith.constant 0 : i32
    %c0_i32_1 = arith.constant 0 : i32
    return %arg0, %c0_i32, %c0_i32_0 : i32, i32, i32
  }
}

</mosaic_0001>

<llo_original>
// kernel: tpu_custom_call.1
$region0: #{tpu_custom_call.1}
  #allocation0 [shape = 'u32[]', space=smem, size = 0x4, offset = 0x4, fixed_abs, tag = 'smem constant byte address 0x4 - core index']
  #allocation1 [shape = 'u32[144,128]{1,0:T(1,128)}', space=vmem, size = 0x12000, scoped, tag = 'internal scratch']
  %s0 = inlined_call_operand.hbm [shape: f32[2,8,256], index: 0, kind: input, shape index: {}]
  %s1 = inlined_call_operand.vmem [shape: f32[2,8], index: 1, kind: input, shape index: {}]
  %s2 = inlined_call_operand.vmem [shape: f32[8,2], index: 2, kind: input, shape index: {}]
  %s3 = inlined_call_operand.hbm [shape: f32[2,8,256], index: 3, kind: output, shape index: {}]
  %s4 = sld [smem:[#allocation0]]
  $region26: #{tpu_custom_call.1} parent=0
    _
  %s6 = ssub.s32 1, %s4
  %s7 = scalar_select 0, %s6, %s4
  $region1: #{tpu_custom_call.1} parent=0
    #allocation2 [shape = 'u8[16384]{0}', space=vmem, size = 0x4000, scoped, tag = 'input window, operand 0, single buffered']
    #allocation3 [shape = 's32[1]{0}', space=sflag, size = 0x4, scoped, tag = 'scoped memory for tpu_custom_call.1']
    #allocation4 [shape = 's32[1]{0}', space=sflag, size = 0x4, scoped, tag = 'scoped memory for tpu_custom_call.1']
    #allocation5 [shape = 'u8[16384]{0}', space=vmem, size = 0x4000, scoped, tag = 'output window, operand 0, single buffered']
    %8 = vsyncpa [#allocation3], 0
    %9 = vsyncpa [#allocation4], 0
    // Predicated region
    $region2: #{tpu_custom_call.1} parent=1 // pred_check
      _
    $region3: #{tpu_custom_call.1} parent=1 // pred_check_branch
      %11 = sbr.rel (0) target = $region5
    $region4: #{tpu_custom_call.1} parent=1 // pred_region
      %s13 = ssub.s32 512, 512
      %14 = vsyncadd [#allocation3], %s13
      %s15 = sshll.u32 [#allocation2], 4
      %s16 = int_to_ptr.vmem [resolvable:$true] %s15
      %21 = dma.hbm_to_vmem [thread:$0]  %s0, 512, %s16, [#allocation3], 256, 256, 16
    $region5: #{tpu_custom_call.1} parent=1 // pred_fallthru
      _
    // Predicated region
    $region6: #{tpu_custom_call.1} parent=1 // pred_check
      _
    $region7: #{tpu_custom_call.1} parent=1 // pred_check_branch
      %23 = sbr.rel (0) target = $region9
    $region8: #{tpu_custom_call.1} parent=1 // pred_region
      _
    $region9: #{tpu_custom_call.1} parent=1 // pred_fallthru
      _
    // Predicated region
    $region10: #{tpu_custom_call.1} parent=1 // pred_check
      _
    $region11: #{tpu_custom_call.1} parent=1 // pred_check_branch
      %25 = sbr.rel (0) target = $region13
    $region12: #{tpu_custom_call.1} parent=1 // pred_region
      _
    $region13: #{tpu_custom_call.1} parent=1 // pred_fallthru
      _
    // Predicated region
    $region14: #{tpu_custom_call.1} parent=1 // pred_check
      _
    $region15: #{tpu_custom_call.1} parent=1 // pred_check_branch
      %27 = sbr.rel (0) target = $region17
    $region16: #{tpu_custom_call.1} parent=1 // pred_region
      %28 = dma.done [#allocation3], 512
    $region17: #{tpu_custom_call.1} parent=1 // pred_fallthru
      _
    %v29 = vld [vmem:[#allocation2] sm:$0xff]
    %v30 = vld [vmem:[#allocation2 + $0x8] sm:$0xff]
    %v31 = vld [vmem:[#allocation2 + $0x10] sm:$0xff]
    %v32 = vld [vmem:[#allocation2 + $0x18] sm:$0xff]
    %v33 = vadd.f32 %v29, %v30
    %34 = vadd.xlane.f32.xlu0 %v33
    %v35 = vpop.xlane.xlu0 %34
    %v36 = vadd.f32 %v31, %v32
    %37 = vadd.xlane.f32.xlu0 %v36
    %v38 = vpop.xlane.xlu0 %37
    %v39 = vmul.f32 %v35, 0.00390625
    %v40 = vmul.f32 %v38, 0.00390625
    %v41 = vld [vmem:[%s1] sm:$0x3]
    %v42 = vld [vmem:[%s2] sm:$0xff]
    %v45 = vlaneseq
    %v46 = vand.u32 %v45, 127
    %v47 = vlaneseq
    %v48 = vshrl.u32 %v47, 7
    %v49 = vsub.s32 %v46, %v48
    %v50 = vrot.slane %v39, %v49
    %v51 = vlaneseq
    %v52 = vshrl.u32 %v51, 7
    %v53 = vsub.s32 %v46, %v52
    %v54 = vrot.slane %v40, %v53
    %v57 = vmul.f32 %v41, %v50
    %v58 = vmul.f32 %v41, %v54
    %vm59 = vcmask 58368
    %v60 = vsel %vm59, %v57, 0.0
    %61 = vadd.xlane.f32.xlu0 %v60
    %v62 = vpop.xlane.xlu0 %61
    %v63 = vsel %vm59, %v58, 0.0
    %64 = vadd.xlane.f32.xlu0 %v63
    %v65 = vpop.xlane.xlu0 %64
    %v66 = vmax.f32 %v62, 0.0
    %v67 = vmax.f32 %v65, 0.0
    %v70 = vlaneseq
    %v71 = vshrl.u32 %v70, 7
    %v72 = vsub.s32 %v46, %v71
    %v73 = vrot.slane %v66, %v72
    %v74 = vlaneseq
    %v75 = vshrl.u32 %v74, 7
    %v76 = vsub.s32 %v46, %v75
    %v77 = vrot.slane %v67, %v76
    %vm78 = vcmask 1042434
    %v79 = vsel %vm78, %v73, %v73
    %vm80 = vcmask 1043459
    %v81 = vsel %vm80, %v73, %v79
    %vm82 = vcmask 1044484
    %v83 = vsel %vm82, %v73, %v81
    %vm84 = vcmask 1045509
    %v85 = vsel %vm84, %v73, %v83
    %vm86 = vcmask 1046534
    %v87 = vsel %vm86, %v73, %v85
    %vm88 = vcmask 1047559
    %v89 = vsel %vm88, %v73, %v87
    %v90 = vsel %vm78, %v77, %v77
    %v91 = vsel %vm80, %v77, %v90
    %v92 = vsel %vm82, %v77, %v91
    %v93 = vsel %vm84, %v77, %v92
    %v94 = vsel %vm86, %v77, %v93
    %v95 = vsel %vm88, %v77, %v94
    %v98 = vmul.f32 %v42, %v89
    %v99 = vmul.f32 %v42, %v95
    %vm100 = vcmask 15360
    %v101 = vsel %vm100, %v98, 0.0
    %102 = vadd.xlane.f32.xlu0 %v101
    %v103 = vpop.xlane.xlu0 %102
    %v104 = vsel %vm100, %v99, 0.0
    %105 = vadd.xlane.f32.xlu0 %v104
    %v106 = vpop.xlane.xlu0 %105
    %v107 = vxor.u32 %v103, 2147483648
    %v108 = vxor.u32 %v106, 2147483648
    %v109 = vmul.f32 %v107, 1.442695
    %v110 = vpow.pop %v109
    %v111 = vmul.f32 %v108, 1.442695
    %v112 = vpow.pop %v111
    %v113 = vadd.f32 %v110, 1.0
    %v114 = vadd.f32 %v112, 1.0
    %v115 = vrcp.pop %v113
    %v116 = vmul.f32 1.0, %v115
    %v117 = vrcp.pop %v114
    %v118 = vmul.f32 1.0, %v117
    %v119 = vmul.f32 %v29, %v116
    %v120 = vmul.f32 %v30, %v116
    %v121 = vmul.f32 %v31, %v118
    %v122 = vmul.f32 %v32, %v118
    %123 = vst [vmem:[#allocation5] sm:$0xff] %v119
    %124 = vst [vmem:[#allocation5 + $0x8] sm:$0xff] %v120
    %125 = vst [vmem:[#allocation5 + $0x10] sm:$0xff] %v121
    %126 = vst [vmem:[#allocation5 + $0x18] sm:$0xff] %v122
    // Predicated region
    $region18: #{tpu_custom_call.1} parent=1 // pred_check
      _
    $region19: #{tpu_custom_call.1} parent=1 // pred_check_branch
      %128 = sbr.rel (0) target = $region21
    $region20: #{tpu_custom_call.1} parent=1 // pred_region
      %s130 = ssub.s32 512, 512
      %131 = vsyncadd [#allocation4], %s130
      %s132 = sshll.u32 [#allocation5], 4
      %s133 = int_to_ptr.vmem [resolvable:$true] %s132
      %138 = dma.vmem_to_hbm [thread:$0]  %s133, 512, %s3, [#allocation4], 256, 256, 16
    $region21: #{tpu_custom_call.1} parent=1 // pred_fallthru
      _
    // Predicated region
    $region22: #{tpu_custom_call.1} parent=1 // pred_check
      _
    $region23: #{tpu_custom_call.1} parent=1 // pred_check_branch
      %140 = sbr.rel (0) target = $region25
    $region24: #{tpu_custom_call.1} parent=1 // pred_region
      %141 = dma.done [#allocation4], 512
    $region25: #{tpu_custom_call.1} parent=1 // pred_fallthru
      _
    %142 = vsyncpa [#allocation3], 1
    %143 = vsyncpa [#allocation4], 1

</llo_original>
